<compile_context>
chip_gen: v7x
topology: tpu7x:2x2x1
jax: 0.10.0
libtpu: 0.0.40
codegen_flags: <defaults>
</compile_context>

<pallas_src>
import functools

import jax
import jax.numpy as jnp
from jax import lax
from jax.experimental import pallas as pl
from jax.experimental.pallas import tpu as pltpu


def _make_mlp_kernel(num_layers: int, sigmoid_output: bool,
                     transpose_out: bool, compute_dtype):
    """Fused kernel: all Linear(+ReLU) layers for one row-tile of x."""

    def kernel(x_ref, *refs):
        out_ref = refs[-1]
        params = refs[:-1]  # w0, b0, w1, b1, ...

        h = x_ref[...].astype(compute_dtype)

        # Hidden layers: rows on the MXU M axis; weights are (in, out).
        for i in range(num_layers - 1):
            w = params[2 * i][...].astype(compute_dtype)        # (d_in_i, d_out_i)
            b = params[2 * i + 1][...].astype(jnp.float32)      # (1, d_out_i)
            h = jnp.dot(h, w, preferred_element_type=jnp.float32) + b
            h = jnp.maximum(h, 0.0).astype(compute_dtype)       # ReLU (VPU)

        # Final layer.
        i = num_layers - 1
        w = params[2 * i][...].astype(compute_dtype)
        b = params[2 * i + 1][...].astype(jnp.float32)
        if transpose_out:
            # w: (d_out, d_in_last)  [PyTorch layout], b: (d_out, 1).
            # y^T = W @ h^T  -> (d_out, rows): lane-dense store on the row axis.
            y = lax.dot_general(w, h, (((1,), (1,)), ((), ())),
                                preferred_element_type=jnp.float32) + b
        else:
            # w: (d_in_last, d_out), b: (1, d_out).
            y = jnp.dot(h, w, preferred_element_type=jnp.float32) + b

        if sigmoid_output:
            y = jax.nn.sigmoid(y)                                # EUP
        out_ref[...] = y.astype(out_ref.dtype)

    return kernel


def mlp_forward(x, weights, biases, *, sigmoid_output: bool = False,
                tm: int = 512, max_single_block_rows: int = 2048,
                compute_dtype=None):
    """Run the MLP on x (..., input_dim).

    weights[i]: (out_i, in_i)   (PyTorch nn.Linear convention)
    biases[i]:  (out_i,)
    compute_dtype: dtype of matmul operands (accumulation is always f32);
                   pass jnp.bfloat16 for the real 256-wide dims on v6e/v7x.
    """
    num_layers = len(weights)
    orig_shape = x.shape
    d_in = orig_shape[-1]
    d_out = weights[-1].shape[0]
    if compute_dtype is None:
        compute_dtype = x.dtype

    x2d = x.reshape(-1, d_in)
    n_rows = x2d.shape[0]

    # Lane-dense output path: store (d_out, rows) when d_out alone would
    # force masked partial-lane stores.
    transpose_out = (d_out % 128) != 0

    if n_rows <= max_single_block_rows:
        # Single grid step over the whole, un-padded array (full-array blocks
        # are exempt from the (8, 128) divisibility rule) -> no pad/slice.
        tile_rows = n_rows
        grid = (1,)
    else:
        # Row-tiled grid; tm is a multiple of 8 (sublanes) and 128 (lanes).
        # The ragged final block relies on Pallas' clamped edge-block access
        # (rows are independent, so garbage padding rows never contaminate
        # valid rows and their writes are masked off).
        tile_rows = tm
        grid = (pl.cdiv(n_rows, tile_rows),)

    # Parameter blocks: whole arrays, constant index map -> VMEM-resident.
    in_specs = [pl.BlockSpec((tile_rows, d_in), lambda i: (i, 0))]
    param_args = []
    for li, (w, b) in enumerate(zip(weights, biases)):
        if li == num_layers - 1 and transpose_out:
            wk = w                    # (out, in)  — used as W @ h^T
            bk = b.reshape(-1, 1)     # (out, 1)
        else:
            wk = jnp.transpose(w)     # (in, out)
            bk = b.reshape(1, -1)     # (1, out)
        in_specs.append(pl.BlockSpec(wk.shape, lambda i: (0, 0)))
        in_specs.append(pl.BlockSpec(bk.shape, lambda i: (0, 0)))
        param_args.extend([wk, bk])

    if transpose_out:
        out_shape = jax.ShapeDtypeStruct((d_out, n_rows), x.dtype)
        out_spec = pl.BlockSpec((d_out, tile_rows), lambda i: (0, i))
    else:
        out_shape = jax.ShapeDtypeStruct((n_rows, d_out), x.dtype)
        out_spec = pl.BlockSpec((tile_rows, d_out), lambda i: (i, 0))

    kernel = _make_mlp_kernel(num_layers, sigmoid_output, transpose_out,
                              compute_dtype)

    out = pl.pallas_call(
        kernel,
        out_shape=out_shape,
        grid=grid,
        in_specs=in_specs,
        out_specs=out_spec,
        compiler_params=pltpu.CompilerParams(
            dimension_semantics=("parallel",)),
    )(x2d, *param_args)

    if transpose_out:
        out = out.T  # small (rows, d_out) result; cheap relative to input read
    return out.reshape(*orig_shape[:-1], d_out)


def _reference_mlp(x, weights, biases, sigmoid_output):
    h = x
    n = len(weights)
    for i, (w, b) in enumerate(zip(weights, biases)):
        h = h @ w.T + b
        if i < n - 1:
            h = jnp.maximum(h, 0.0)
    if sigmoid_output:
        h = jax.nn.sigmoid(h)
    return h


if __name__ == "__main__":
    # Module config (matches MLP(__init__) semantics):
    input_dim, hidden_dim, output_dim, num_layers = 32, 32, 16, 3
    sigmoid_output = False

    key = jax.random.PRNGKey(0)
    kx, *kparams = jax.random.split(key, 1 + 2 * num_layers)

    batch, seq = 2, 8
    x = jax.random.normal(kx, (batch, seq, input_dim), dtype=jnp.float32)

    dims = [input_dim] + [hidden_dim] * (num_layers - 1) + [output_dim]
    weights, biases = [], []
    for i in range(num_layers):
        n_in, n_out = dims[i], dims[i + 1]
        w = jax.random.normal(kparams[2 * i], (n_out, n_in), jnp.float32) * 0.1
        b = jax.random.normal(kparams[2 * i + 1], (n_out,), jnp.float32) * 0.1
        weights.append(w)
        biases.append(b)

    fwd = jax.jit(functools.partial(mlp_forward, sigmoid_output=sigmoid_output))
    out = fwd(x, weights, biases)
    out = jax.block_until_ready(out)

    ref = _reference_mlp(x, weights, biases, sigmoid_output)
    assert out.shape == (batch, seq, output_dim), out.shape
    assert jnp.allclose(out, ref, atol=1e-5, rtol=1e-5), "mismatch vs reference"

    print("KERNEL_OK")
</pallas_src>

<mosaic_0001>
module attributes {stable_mosaic.version = 11 : i64} {
  func.func @kernel(%arg0: i32, %arg1: memref<16x32xf32, #tpu.memory_space<vmem>>, %arg2: memref<32x32xf32, #tpu.memory_space<vmem>>, %arg3: memref<1x32xf32, #tpu.memory_space<vmem>>, %arg4: memref<32x32xf32, #tpu.memory_space<vmem>>, %arg5: memref<1x32xf32, #tpu.memory_space<vmem>>, %arg6: memref<16x32xf32, #tpu.memory_space<vmem>>, %arg7: memref<16x1xf32, #tpu.memory_space<vmem>>, %arg8: memref<16x16xf32, #tpu.memory_space<vmem>>) attributes {dimension_semantics = [#tpu.dimension_semantics<parallel>], iteration_bounds = array<i64: 1>, scalar_prefetch = 0 : i64, scratch_operands = 0 : i64, tpu.core_type = #tpu.core_type<tc>, window_params = [{transform_indices = @transform_0, window_bounds = array<i64: 16, 32>}, {pipeline_mode = #tpu.pipeline_mode<synchronous>, transform_indices = @transform_1, window_bounds = array<i64: 32, 32>}, {pipeline_mode = #tpu.pipeline_mode<synchronous>, transform_indices = @transform_2, window_bounds = array<i64: 1, 32>}, {pipeline_mode = #tpu.pipeline_mode<synchronous>, transform_indices = @transform_3, window_bounds = array<i64: 32, 32>}, {pipeline_mode = #tpu.pipeline_mode<synchronous>, transform_indices = @transform_4, window_bounds = array<i64: 1, 32>}, {pipeline_mode = #tpu.pipeline_mode<synchronous>, transform_indices = @transform_5, window_bounds = array<i64: 16, 32>}, {pipeline_mode = #tpu.pipeline_mode<synchronous>, transform_indices = @transform_6, window_bounds = array<i64: 16, 1>}, {transform_indices = @transform_7, window_bounds = array<i64: 16, 16>}]} {
    %c0 = arith.constant 0 : index
    %c0_0 = arith.constant 0 : index
    %0 = vector.load %arg1[%c0, %c0_0] : memref<16x32xf32, #tpu.memory_space<vmem>>, vector<16x32xf32>
    %c0_1 = arith.constant 0 : index
    %c0_2 = arith.constant 0 : index
    %1 = vector.load %arg2[%c0_1, %c0_2] : memref<32x32xf32, #tpu.memory_space<vmem>>, vector<32x32xf32>
    %c0_3 = arith.constant 0 : index
    %c0_4 = arith.constant 0 : index
    %2 = vector.load %arg3[%c0_3, %c0_4] : memref<1x32xf32, #tpu.memory_space<vmem>>, vector<1x32xf32>
    %cst = arith.constant dense<0.000000e+00> : vector<16x32xf32>
    %3 = tpu.matmul %0, %1, %cst {dimension_numbers = #tpu.dot_dimension_numbers<[1], [0], [0], [1], [0, 0, 1, 1], [], []>} : vector<16x32xf32>, vector<32x32xf32>, vector<16x32xf32> -> vector<16x32xf32>
    %4 = vector.broadcast %2 : vector<1x32xf32> to vector<16x32xf32>
    %5 = arith.addf %3, %4 : vector<16x32xf32>
    %cst_5 = arith.constant 0.000000e+00 : f32
    %6 = vector.broadcast %cst_5 : f32 to vector<16x32xf32>
    %7 = arith.maximumf %5, %6 : vector<16x32xf32>
    %c0_6 = arith.constant 0 : index
    %c0_7 = arith.constant 0 : index
    %8 = vector.load %arg4[%c0_6, %c0_7] : memref<32x32xf32, #tpu.memory_space<vmem>>, vector<32x32xf32>
    %c0_8 = arith.constant 0 : index
    %c0_9 = arith.constant 0 : index
    %9 = vector.load %arg5[%c0_8, %c0_9] : memref<1x32xf32, #tpu.memory_space<vmem>>, vector<1x32xf32>
    %cst_10 = arith.constant dense<0.000000e+00> : vector<16x32xf32>
    %10 = tpu.matmul %7, %8, %cst_10 {dimension_numbers = #tpu.dot_dimension_numbers<[1], [0], [0], [1], [0, 0, 1, 1], [], []>} : vector<16x32xf32>, vector<32x32xf32>, vector<16x32xf32> -> vector<16x32xf32>
    %11 = vector.broadcast %9 : vector<1x32xf32> to vector<16x32xf32>
    %12 = arith.addf %10, %11 : vector<16x32xf32>
    %cst_11 = arith.constant 0.000000e+00 : f32
    %13 = vector.broadcast %cst_11 : f32 to vector<16x32xf32>
    %14 = arith.maximumf %12, %13 : vector<16x32xf32>
    %c0_12 = arith.constant 0 : index
    %c0_13 = arith.constant 0 : index
    %15 = vector.load %arg6[%c0_12, %c0_13] : memref<16x32xf32, #tpu.memory_space<vmem>>, vector<16x32xf32>
    %c0_14 = arith.constant 0 : index
    %c0_15 = arith.constant 0 : index
    %16 = vector.load %arg7[%c0_14, %c0_15] : memref<16x1xf32, #tpu.memory_space<vmem>>, vector<16x1xf32>
    %cst_16 = arith.constant dense<0.000000e+00> : vector<16x16xf32>
    %17 = tpu.matmul %15, %14, %cst_16 {dimension_numbers = #tpu.dot_dimension_numbers<[1], [1], [0], [0], [0, 0, 1, 0], [], []>} : vector<16x32xf32>, vector<16x32xf32>, vector<16x16xf32> -> vector<16x16xf32>
    %18 = vector.broadcast %16 : vector<16x1xf32> to vector<16x16xf32>
    %19 = arith.addf %17, %18 : vector<16x16xf32>
    %c0_17 = arith.constant 0 : index
    %c0_18 = arith.constant 0 : index
    %20 = vector.load %arg8[%c0_17, %c0_18] : memref<16x16xf32, #tpu.memory_space<vmem>>, vector<16x16xf32>
    tpu.vector_store %arg8[%c0_17, %c0_18], %19 {strides = array<i32>} : memref<16x16xf32, #tpu.memory_space<vmem>>, vector<16x16xf32>,
    return
  }
  func.func @transform_0(%arg0: i32) -> (i32, i32) {
    %c0_i32 = arith.constant 0 : i32
    %c0_i32_0 = arith.constant 0 : i32
    return %arg0, %c0_i32 : i32, i32
  }
  func.func @transform_1(%arg0: i32) -> (i32, i32) {
    %c0_i32 = arith.constant 0 : i32
    %c0_i32_0 = arith.constant 0 : i32
    %c0_i32_1 = arith.constant 0 : i32
    return %c0_i32, %c0_i32_0 : i32, i32
  }
  func.func @transform_2(%arg0: i32) -> (i32, i32) {
    %c0_i32 = arith.constant 0 : i32
    %c0_i32_0 = arith.constant 0 : i32
    %c0_i32_1 = arith.constant 0 : i32
    return %c0_i32, %c0_i32_0 : i32, i32
  }
  func.func @transform_3(%arg0: i32) -> (i32, i32) {
    %c0_i32 = arith.constant 0 : i32
    %c0_i32_0 = arith.constant 0 : i32
    %c0_i32_1 = arith.constant 0 : i32
    return %c0_i32, %c0_i32_0 : i32, i32
  }
  func.func @transform_4(%arg0: i32) -> (i32, i32) {
    %c0_i32 = arith.constant 0 : i32
    %c0_i32_0 = arith.constant 0 : i32
    %c0_i32_1 = arith.constant 0 : i32
    return %c0_i32, %c0_i32_0 : i32, i32
  }
  func.func @transform_5(%arg0: i32) -> (i32, i32) {
    %c0_i32 = arith.constant 0 : i32
    %c0_i32_0 = arith.constant 0 : i32
    %c0_i32_1 = arith.constant 0 : i32
    return %c0_i32, %c0_i32_0 : i32, i32
  }
  func.func @transform_6(%arg0: i32) -> (i32, i32) {
    %c0_i32 = arith.constant 0 : i32
    %c0_i32_0 = arith.constant 0 : i32
    %c0_i32_1 = arith.constant 0 : i32
    return %c0_i32, %c0_i32_0 : i32, i32
  }
  func.func @transform_7(%arg0: i32) -> (i32, i32) {
    %c0_i32 = arith.constant 0 : i32
    %c0_i32_0 = arith.constant 0 : i32
    return %c0_i32, %arg0 : i32, i32
  }
}

</mosaic_0001>

<llo_original>
// kernel: mlp_forward.1
$region0: #{mlp_forward.1}
  #allocation0 [shape = 'u32[]', space=smem, size = 0x4, offset = 0x4, fixed_abs, tag = 'smem constant byte address 0x4 - core index']
  #allocation1 [shape = 'u32[144,128]{1,0:T(1,128)}', space=vmem, size = 0x12000, scoped, tag = 'internal scratch']
  %s0 = inlined_call_operand.vmem [shape: f32[16,32], index: 0, kind: input, shape index: {}]
  %s1 = inlined_call_operand.vmem [shape: f32[32,32], index: 1, kind: input, shape index: {}]
  %s2 = inlined_call_operand.vmem [shape: f32[1,32], index: 2, kind: input, shape index: {}]
  %s3 = inlined_call_operand.vmem [shape: f32[32,32], index: 3, kind: input, shape index: {}]
  %s4 = inlined_call_operand.vmem [shape: f32[1,32], index: 4, kind: input, shape index: {}]
  %s5 = inlined_call_operand.vmem [shape: f32[16,32], index: 5, kind: input, shape index: {}]
  %s6 = inlined_call_operand.vmem [shape: f32[16,1], index: 6, kind: input, shape index: {}]
  %s7 = inlined_call_operand.vmem [shape: f32[16,16], index: 7, kind: output, shape index: {}]
  %s8 = sld [smem:[#allocation0]]
  $region38: #{mlp_forward.1} parent=0
    _
  %s10 = ssub.s32 1, %s8
  %s11 = scalar_select 0, %s10, %s8
  // Predicated region
  $region2: #{mlp_forward.1} parent=0 // pred_check
    _
  $region3: #{mlp_forward.1} parent=0 // pred_check_branch
    %13 = sbr.rel (0) target = $region5
  $region4: #{mlp_forward.1} parent=0 // pred_region
    _
  $region5: #{mlp_forward.1} parent=0 // pred_fallthru
    _
  // Predicated region
  $region6: #{mlp_forward.1} parent=0 // pred_check
    _
  $region7: #{mlp_forward.1} parent=0 // pred_check_branch
    %15 = sbr.rel (0) target = $region9
  $region8: #{mlp_forward.1} parent=0 // pred_region
    _
  $region9: #{mlp_forward.1} parent=0 // pred_fallthru
    _
  // Predicated region
  $region10: #{mlp_forward.1} parent=0 // pred_check
    _
  $region11: #{mlp_forward.1} parent=0 // pred_check_branch
    %17 = sbr.rel (0) target = $region13
  $region12: #{mlp_forward.1} parent=0 // pred_region
    _
  $region13: #{mlp_forward.1} parent=0 // pred_fallthru
    _
  // Predicated region
  $region14: #{mlp_forward.1} parent=0 // pred_check
    _
  $region15: #{mlp_forward.1} parent=0 // pred_check_branch
    %19 = sbr.rel (0) target = $region17
  $region16: #{mlp_forward.1} parent=0 // pred_region
    _
  $region17: #{mlp_forward.1} parent=0 // pred_fallthru
    _
  // Predicated region
  $region18: #{mlp_forward.1} parent=0 // pred_check
    _
  $region19: #{mlp_forward.1} parent=0 // pred_check_branch
    %21 = sbr.rel (0) target = $region21
  $region20: #{mlp_forward.1} parent=0 // pred_region
    _
  $region21: #{mlp_forward.1} parent=0 // pred_fallthru
    _
  // Predicated region
  $region22: #{mlp_forward.1} parent=0 // pred_check
    _
  $region23: #{mlp_forward.1} parent=0 // pred_check_branch
    %23 = sbr.rel (0) target = $region25
  $region24: #{mlp_forward.1} parent=0 // pred_region
    _
  $region25: #{mlp_forward.1} parent=0 // pred_fallthru
    _
  // Predicated region
  $region26: #{mlp_forward.1} parent=0 // pred_check
    _
  $region27: #{mlp_forward.1} parent=0 // pred_check_branch
    %25 = sbr.rel (0) target = $region29
  $region28: #{mlp_forward.1} parent=0 // pred_region
    _
  $region29: #{mlp_forward.1} parent=0 // pred_fallthru
    _
  %v26 = vld [vmem:[%s0] sm:$0xff]
  %v27 = vld [vmem:[%s0 + $0x8] sm:$0xff]
  %v28 = vld [vmem:[%s1] sm:$0xff]
  %v29 = vld [vmem:[%s1 + $0x8] sm:$0xff]
  %v30 = vld [vmem:[%s1 + $0x10] sm:$0xff]
  %v31 = vld [vmem:[%s1 + $0x18] sm:$0xff]
  %v32 = vld [vmem:[%s2] sm:$0x1]
  %v34 = vlaneseq
  %v35 = vshrl.u32 %v34, 7
  %v36 = vsub.s32 0, %v35
  %v37 = vrot.slane %v32, %v36
  %vm39 = vcmask 261120
  %v41 = vsel %vm39, %v26, 0
  %v44 = vsel %vm39, %v27, 0
  %46 = vmatprep.subr.mxu0 0.0
  %47 = vmatpush1.msra.mxu0 %v28
  %48 = vmatprep.subr.mxu0 0.0
  %49 = vmatpush1.msra.mxu0 %v29
  %50 = vmatprep.subr.mxu0 0.0
  %51 = vmatpush1.msra.mxu0 %v30
  %52 = vmatprep.subr.mxu0 0.0
  %53 = vmatpush1.msra.mxu0 %v31
  %54 = vmatprep.subr.mxu0 0.0
  %55 = vmatpush1.msra.mxu0 0.0
  %56 = vmatprep.subr.mxu0 0.0
  %57 = vmatpush1.msra.mxu0 0.0
  %58 = vmatprep.subr.mxu0 0.0
  %59 = vmatpush1.msra.mxu0 0.0
  %60 = vmatprep.subr.mxu0 0.0
  %61 = vmatpush1.msra.mxu0 0.0
  %62 = vmatprep.subr.mxu0 0.0
  %63 = vmatpush1.msra.mxu0 0.0
  %64 = vmatprep.subr.mxu0 0.0
  %65 = vmatpush1.msra.mxu0 0.0
  %66 = vmatprep.subr.mxu0 0.0
  %67 = vmatpush1.msra.mxu0 0.0
  %68 = vmatprep.subr.mxu0 0.0
  %69 = vmatpush1.msra.mxu0 0.0
  %70 = vmatprep.subr.mxu0 0.0
  %71 = vmatpush1.msra.mxu0 0.0
  %72 = vmatprep.subr.mxu0 0.0
  %73 = vmatpush1.msra.mxu0 0.0
  %74 = vmatprep.subr.mxu0 0.0
  %75 = vmatpush1.msra.mxu0 0.0
  %76 = vmatprep.subr.mxu0 0.0
  %77 = vmatpush1.msra.mxu0 0.0
  %78 = vmatprep.subr.mxu0 0.0
  %79 = vmatpush1.msra.mxu0 0.0
  %80 = vmatprep.subr.mxu0 0.0
  %81 = vmatpush1.msra.mxu0 0.0
  %82 = vmatprep.subr.mxu0 0.0
  %83 = vmatpush1.msra.mxu0 0.0
  %84 = vmatprep.subr.mxu0 0.0
  %85 = vmatpush1.msra.mxu0 0.0
  %86 = vmatprep.subr.mxu0 0.0
  %87 = vmatpush1.msra.mxu0 0.0
  %88 = vmatprep.subr.mxu0 0.0
  %89 = vmatpush1.msra.mxu0 0.0
  %90 = vmatprep.subr.mxu0 0.0
  %91 = vmatpush1.msra.mxu0 0.0
  %92 = vmatprep.subr.mxu0 0.0
  %93 = vmatpush1.msra.mxu0 0.0
  %94 = vmatprep.subr.mxu0 0.0
  %95 = vmatpush1.msra.mxu0 0.0
  %96 = vmatprep.subr.mxu0 0.0
  %97 = vmatpush1.msra.mxu0 0.0
  %98 = vmatprep.subr.mxu0 0.0
  %99 = vmatpush1.msra.mxu0 0.0
  %100 = vmatprep.subr.mxu0 0.0
  %101 = vmatpush1.msra.mxu0 0.0
  %102 = vmatprep.subr.mxu0 0.0
  %103 = vmatpush1.msra.mxu0 0.0
  %104 = vmatprep.subr.mxu0 0.0
  %105 = vmatpush1.msra.mxu0 0.0
  %106 = vmatprep.subr.mxu0 0.0
  %107 = vmatpush1.msra.mxu0 0.0
  %108 = vmatprep.subr.mxu0 0.0
  %109 = vmatpush1.msra.mxu0 0.0
  %110 = vmatprep.mubr.f32.mxu0 0.0
  %111 = vmatmul.mubr.f32.gmra.mrb[0].mxu0 %v41
  %v112 = vpop.f32.mrb[0].mxu0
  %v113 = vadd.f32 %v37, %v112
  %v114 = vpop.f32.mrb[0].mxu0
  %115 = vmatprep.mubr.f32.mxu0 0.0
  %116 = vmatmul.mubr.f32.gmra.mrb[0].mxu0 %v44
  %v117 = vpop.f32.mrb[0].mxu0
  %v118 = vadd.f32 %v37, %v117
  %v119 = vpop.f32.mrb[0].mxu0
  %120 = vdwg.mxu0
  %v121 = vmax.f32 %v113, 0.0
  %v122 = vmax.f32 %v118, 0.0
  %v123 = vld [vmem:[%s3] sm:$0xff]
  %v124 = vld [vmem:[%s3 + $0x8] sm:$0xff]
  %v125 = vld [vmem:[%s3 + $0x10] sm:$0xff]
  %v126 = vld [vmem:[%s3 + $0x18] sm:$0xff]
  %v127 = vld [vmem:[%s4] sm:$0x1]
  %v129 = vlaneseq
  %v130 = vshrl.u32 %v129, 7
  %v131 = vsub.s32 0, %v130
  %v132 = vrot.slane %v127, %v131
  %v135 = vsel %vm39, %v121, 0
  %v138 = vsel %vm39, %v122, 0
  %140 = vmatprep.subr.mxu0 0.0
  %141 = vmatpush1.msra.mxu0 %v123
  %142 = vmatprep.subr.mxu0 0.0
  %143 = vmatpush1.msra.mxu0 %v124
  %144 = vmatprep.subr.mxu0 0.0
  %145 = vmatpush1.msra.mxu0 %v125
  %146 = vmatprep.subr.mxu0 0.0
  %147 = vmatpush1.msra.mxu0 %v126
  %148 = vmatprep.subr.mxu0 0.0
  %149 = vmatpush1.msra.mxu0 0.0
  %150 = vmatprep.subr.mxu0 0.0
  %151 = vmatpush1.msra.mxu0 0.0
  %152 = vmatprep.subr.mxu0 0.0
  %153 = vmatpush1.msra.mxu0 0.0
  %154 = vmatprep.subr.mxu0 0.0
  %155 = vmatpush1.msra.mxu0 0.0
  %156 = vmatprep.subr.mxu0 0.0
  %157 = vmatpush1.msra.mxu0 0.0
  %158 = vmatprep.subr.mxu0 0.0
  %159 = vmatpush1.msra.mxu0 0.0
  %160 = vmatprep.subr.mxu0 0.0
  %161 = vmatpush1.msra.mxu0 0.0
  %162 = vmatprep.subr.mxu0 0.0
  %163 = vmatpush1.msra.mxu0 0.0
  %164 = vmatprep.subr.mxu0 0.0
  %165 = vmatpush1.msra.mxu0 0.0
  %166 = vmatprep.subr.mxu0 0.0
  %167 = vmatpush1.msra.mxu0 0.0
  %168 = vmatprep.subr.mxu0 0.0
  %169 = vmatpush1.msra.mxu0 0.0
  %170 = vmatprep.subr.mxu0 0.0
  %171 = vmatpush1.msra.mxu0 0.0
  %172 = vmatprep.subr.mxu0 0.0
  %173 = vmatpush1.msra.mxu0 0.0
  %174 = vmatprep.subr.mxu0 0.0
  %175 = vmatpush1.msra.mxu0 0.0
  %176 = vmatprep.subr.mxu0 0.0
  %177 = vmatpush1.msra.mxu0 0.0
  %178 = vmatprep.subr.mxu0 0.0
  %179 = vmatpush1.msra.mxu0 0.0
  %180 = vmatprep.subr.mxu0 0.0
  %181 = vmatpush1.msra.mxu0 0.0
  %182 = vmatprep.subr.mxu0 0.0
  %183 = vmatpush1.msra.mxu0 0.0
  %184 = vmatprep.subr.mxu0 0.0
  %185 = vmatpush1.msra.mxu0 0.0
  %186 = vmatprep.subr.mxu0 0.0
  %187 = vmatpush1.msra.mxu0 0.0
  %188 = vmatprep.subr.mxu0 0.0
  %189 = vmatpush1.msra.mxu0 0.0
  %190 = vmatprep.subr.mxu0 0.0
  %191 = vmatpush1.msra.mxu0 0.0
  %192 = vmatprep.subr.mxu0 0.0
  %193 = vmatpush1.msra.mxu0 0.0
  %194 = vmatprep.subr.mxu0 0.0
  %195 = vmatpush1.msra.mxu0 0.0
  %196 = vmatprep.subr.mxu0 0.0
  %197 = vmatpush1.msra.mxu0 0.0
  %198 = vmatprep.subr.mxu0 0.0
  %199 = vmatpush1.msra.mxu0 0.0
  %200 = vmatprep.subr.mxu0 0.0
  %201 = vmatpush1.msra.mxu0 0.0
  %202 = vmatprep.subr.mxu0 0.0
  %203 = vmatpush1.msra.mxu0 0.0
  %204 = vmatprep.mubr.f32.mxu0 0.0
  %205 = vmatmul.mubr.f32.gmra.mrb[0].mxu0 %v135
  %v206 = vpop.f32.mrb[0].mxu0
  %v207 = vadd.f32 %v132, %v206
  %v208 = vpop.f32.mrb[0].mxu0
  %209 = vmatprep.mubr.f32.mxu0 0.0
  %210 = vmatmul.mubr.f32.gmra.mrb[0].mxu0 %v138
  %v211 = vpop.f32.mrb[0].mxu0
  %v212 = vadd.f32 %v132, %v211
  %v213 = vpop.f32.mrb[0].mxu0
  %214 = vdwg.mxu0
  %v215 = vmax.f32 %v207, 0.0
  %v216 = vmax.f32 %v212, 0.0
  %v217 = vld [vmem:[%s5] sm:$0xff]
  %v218 = vld [vmem:[%s5 + $0x8] sm:$0xff]
  %v219 = vld [vmem:[%s6] sm:$0xff]
  %v220 = vld [vmem:[%s6 + $0x8] sm:$0xff]
  %222 = vset.pattern.permute.xlu0 0
  %223 = vperm.xlu0 %222, %v219
  %v224 = vpop.permute.xlu0 %223
  %227 = vset.pattern.permute.xlu0 0
  %228 = vperm.xlu0 %227, %v220
  %v229 = vpop.permute.xlu0 %228
  %v232 = vsel %vm39, %v217, 0
  %v235 = vsel %vm39, %v218, 0
  %v238 = vsel %vm39, %v215, 0
  %v241 = vsel %vm39, %v216, 0
  %243 = vmatprep.subr.mxu0 0.0
  %244 = vmatpush1.xpose.msra.mxu0 %v238
  %245 = vmatprep.subr.mxu0 0.0
  %246 = vmatpush1.xpose.msra.mxu0 %v241
  %247 = vmatprep.subr.mxu0 0.0
  %248 = vmatpush1.xpose.msra.mxu0 0.0
  %249 = vmatprep.subr.mxu0 0.0
  %250 = vmatpush1.xpose.msra.mxu0 0.0
  %251 = vmatprep.subr.mxu0 0.0
  %252 = vmatpush1.xpose.msra.mxu0 0.0
  %253 = vmatprep.subr.mxu0 0.0
  %254 = vmatpush1.xpose.msra.mxu0 0.0
  %255 = vmatprep.subr.mxu0 0.0
  %256 = vmatpush1.xpose.msra.mxu0 0.0
  %257 = vmatprep.subr.mxu0 0.0
  %258 = vmatpush1.xpose.msra.mxu0 0.0
  %259 = vmatprep.subr.mxu0 0.0
  %260 = vmatpush1.xpose.msra.mxu0 0.0
  %261 = vmatprep.subr.mxu0 0.0
  %262 = vmatpush1.xpose.msra.mxu0 0.0
  %263 = vmatprep.subr.mxu0 0.0
  %264 = vmatpush1.xpose.msra.mxu0 0.0
  %265 = vmatprep.subr.mxu0 0.0
  %266 = vmatpush1.xpose.msra.mxu0 0.0
  %267 = vmatprep.subr.mxu0 0.0
  %268 = vmatpush1.xpose.msra.mxu0 0.0
  %269 = vmatprep.subr.mxu0 0.0
  %270 = vmatpush1.xpose.msra.mxu0 0.0
  %271 = vmatprep.subr.mxu0 0.0
  %272 = vmatpush1.xpose.msra.mxu0 0.0
  %273 = vmatprep.subr.mxu0 0.0
  %274 = vmatpush1.xpose.msra.mxu0 0.0
  %275 = vmatprep.subr.mxu0 0.0
  %276 = vmatpush1.xpose.msra.mxu0 0.0
  %277 = vmatprep.subr.mxu0 0.0
  %278 = vmatpush1.xpose.msra.mxu0 0.0
  %279 = vmatprep.subr.mxu0 0.0
  %280 = vmatpush1.xpose.msra.mxu0 0.0
  %281 = vmatprep.subr.mxu0 0.0
  %282 = vmatpush1.xpose.msra.mxu0 0.0
  %283 = vmatprep.subr.mxu0 0.0
  %284 = vmatpush1.xpose.msra.mxu0 0.0
  %285 = vmatprep.subr.mxu0 0.0
  %286 = vmatpush1.xpose.msra.mxu0 0.0
  %287 = vmatprep.subr.mxu0 0.0
  %288 = vmatpush1.xpose.msra.mxu0 0.0
  %289 = vmatprep.subr.mxu0 0.0
  %290 = vmatpush1.xpose.msra.mxu0 0.0
  %291 = vmatprep.subr.mxu0 0.0
  %292 = vmatpush1.xpose.msra.mxu0 0.0
  %293 = vmatprep.subr.mxu0 0.0
  %294 = vmatpush1.xpose.msra.mxu0 0.0
  %295 = vmatprep.subr.mxu0 0.0
  %296 = vmatpush1.xpose.msra.mxu0 0.0
  %297 = vmatprep.subr.mxu0 0.0
  %298 = vmatpush1.xpose.msra.mxu0 0.0
  %299 = vmatprep.subr.mxu0 0.0
  %300 = vmatpush1.xpose.msra.mxu0 0.0
  %301 = vmatprep.subr.mxu0 0.0
  %302 = vmatpush1.xpose.msra.mxu0 0.0
  %303 = vmatprep.subr.mxu0 0.0
  %304 = vmatpush1.xpose.msra.mxu0 0.0
  %305 = vmatprep.subr.mxu0 0.0
  %306 = vmatpush1.xpose.msra.mxu0 0.0
  %307 = vmatprep.mubr.f32.mxu0 0.0
  %308 = vmatmul.mubr.f32.gmra.mrb[0].mxu0 %v232
  %v309 = vpop.f32.mrb[0].mxu0
  %v310 = vadd.f32 %v224, %v309
  %v311 = vpop.f32.mrb[0].mxu0
  %312 = vmatprep.mubr.f32.mxu0 0.0
  %313 = vmatmul.mubr.f32.gmra.mrb[0].mxu0 %v235
  %v314 = vpop.f32.mrb[0].mxu0
  %v315 = vadd.f32 %v229, %v314
  %v316 = vpop.f32.mrb[0].mxu0
  %317 = vdwg.mxu0
  %vm318 = vcmask 130048
  %319 = vst.msk [vmem:[%s7] sm:$0xff] %vm318, %v310
  %320 = vst.msk [vmem:[%s7 + $0x8] sm:$0xff] %vm318, %v315
  // Predicated region
  $region30: #{mlp_forward.1} parent=0 // pred_check
    _
  $region31: #{mlp_forward.1} parent=0 // pred_check_branch
    %322 = sbr.rel (0) target = $region33
  $region32: #{mlp_forward.1} parent=0 // pred_region
    _
  $region33: #{mlp_forward.1} parent=0 // pred_fallthru
    _
  // Predicated region
  $region34: #{mlp_forward.1} parent=0 // pred_check
    _
  $region35: #{mlp_forward.1} parent=0 // pred_check_branch
    %324 = sbr.rel (0) target = $region37
  $region36: #{mlp_forward.1} parent=0 // pred_region
    _
  $region37: #{mlp_forward.1} parent=0 // pred_fallthru
    _

</llo_original>
